<compile_context>
chip_gen: v7x
topology: tpu7x:2x2x1
jax: 0.10.0
libtpu: 0.0.40
codegen_flags: <defaults>
</compile_context>

<pallas_src>
import functools

import jax
import jax.numpy as jnp
from jax import lax
from jax.experimental import pallas as pl
from jax.experimental.pallas import tpu as pltpu


EPS = 1e-5
_MIB = 1024 * 1024


def _round_up(x, m):
    return ((x + m - 1) // m) * m


@functools.lru_cache(maxsize=1)
def _tpu_defaults():
    """(vmem_budget_bytes, vmem_limit_bytes, min_row_blocks) for this TPU generation."""
    vmem_cap = None
    try:
        vmem_cap = getattr(pltpu.get_tpu_info(), "vmem_capacity_bytes", None)
    except Exception:
        vmem_cap = None
    if vmem_cap is None:
        kind = ""
        try:
            kind = jax.devices()[0].device_kind.lower()
        except Exception:
            pass
        # v7x-class parts have ~64 MiB VMEM per TensorCore; v5e/v6e have 128 MiB.
        vmem_cap = 64 * _MIB if "7" in kind else 128 * _MIB
    if vmem_cap >= 96 * _MIB:
        # v5e / v6e: 128 MiB VMEM, single TensorCore per chip.
        return 96 * _MIB, 110 * _MIB, 1
    # v7x-like: smaller VMEM, 2 TensorCores per chip -> want >= 2 row blocks.
    budget = min(40 * _MIB, int(vmem_cap * 0.6))
    limit = min(56 * _MIB, int(vmem_cap * 0.85))
    return budget, limit, 2


def _resident_spec(block_shape, index_map):
    """Grid-invariant operand: resident in VMEM, single-buffered when supported."""
    if hasattr(pl, "Buffered"):
        try:
            return pl.BlockSpec(block_shape, index_map, pipeline_mode=pl.Buffered(1))
        except TypeError:
            pass
    return pl.BlockSpec(block_shape, index_map)


def _choose_tm(n_rows, in_dim, hidden, x_itemsize, w_itemsize, vmem_budget, min_blocks):
    """Largest row tile that fits the VMEM budget and yields >= min_blocks blocks."""
    weight_bufs = 1 if hasattr(pl, "Buffered") else 2
    weights = weight_bufs * (in_dim * hidden + hidden + 8 * hidden) * w_itemsize

    def fits(tm):
        per_step = (2 * tm * in_dim * x_itemsize       # x double buffer
                    + 2 * tm * in_dim * 4              # f32 LN temporaries
                    + tm * in_dim * w_itemsize         # xn cast for the MXU
                    + tm * hidden * (4 + w_itemsize)   # h (f32) + cast for 2nd dot
                    + 2 * tm * 8 * 4)                  # output double buffer
        return weights + per_step <= vmem_budget

    cap = _round_up(max(pl.cdiv(n_rows, max(min_blocks, 1)), 1), 8)
    cap = min(cap, 8192)
    for cand in [cap] + [c for c in (4096, 2048, 1024, 512, 256, 128) if c < cap]:
        if fits(cand):
            return cand
    # TODO(synk): add a K (in_dim) grid axis with an f32 h accumulator when w1
    # alone exceeds the VMEM budget, instead of only shrinking the row tile.
    return min(cap, 128)


def _baseline_kernel(x_ref, w1_ref, b1_ref, w2_ref, b2_ref, o_ref):
    # x_ref: (TM, in_dim) tile of tokens (feature-last).
    x = x_ref[...].astype(jnp.float32)

    # ReducedLayerNorm (gamma already folded into w1 by the wrapper). Stats in
    # f32; downcast the normalized tile to the MXU operand dtype right away to
    # keep the number of live f32 (TM, in_dim) temporaries small.
    mean = jnp.mean(x, axis=-1, keepdims=True)
    xc = x - mean
    var = jnp.mean(xc * xc, axis=-1, keepdims=True)
    xn = (xc * lax.rsqrt(var + EPS)).astype(w1_ref.dtype)          # (TM, in_dim)

    # Linear(in_dim -> hidden) + bias + ReLU; f32 accumulation on the MXU.
    h = jnp.dot(xn, w1_ref[...], preferred_element_type=jnp.float32)
    h = jnp.maximum(h + b1_ref[...].astype(jnp.float32), 0.0)      # (TM, hidden) f32

    # Linear(hidden -> 1) as a plain (TM, hidden) @ (hidden, 8) matmul; column 0
    # of w2_ref is the real weight vector, columns 1..7 are zero.  No transpose
    # of the large h tile; MXU operands stay in the parameter dtype.
    proj = jnp.dot(h.astype(w2_ref.dtype), w2_ref[...],
                   preferred_element_type=jnp.float32)             # (TM, 8)
    o_ref[...] = (proj + b2_ref[0]).astype(o_ref.dtype)


@functools.partial(jax.jit, static_argnames=("tm",))
def baseline_forward(x, gamma, w1, b1, w2, b2, *, tm=None):
    """x: [B, S, in_dim] -> [B, S, 1]."""
    B, S, in_dim = x.shape
    in_dim_w, hidden = w1.shape
    assert in_dim_w == in_dim
    assert b2.size == 1, "Dense output dim must be 1 for the scalar-b2 SMEM path"
    N = B * S

    # Fold the scale-only LayerNorm gamma into w1 (exact up to MXU rounding).
    w1f = (gamma.astype(jnp.float32).reshape(in_dim, 1)
           * w1.astype(jnp.float32)).astype(w1.dtype)

    x2d = x.reshape(N, in_dim)                       # free reshape (leading dims)
    b1_2d = b1.reshape(1, hidden)
    w2_col = w2.reshape(hidden, 1).astype(w1.dtype)
    w2_pad = jnp.pad(w2_col, ((0, 0), (0, 7)))       # (hidden, 8), cols 1..7 zero
    b2_s = b2.reshape(1).astype(jnp.float32)         # (1,) scalar for SMEM

    vmem_budget, vmem_limit, min_blocks = _tpu_defaults()
    if tm is None:
        tm = _choose_tm(N, in_dim, hidden, x.dtype.itemsize, w1.dtype.itemsize,
                        vmem_budget, min_blocks)

    num_blocks = pl.cdiv(N, tm)
    n_pad = num_blocks * tm

    xi = x.dtype.itemsize
    wi = w1.dtype.itemsize
    cost = pl.CostEstimate(
        flops=2 * N * in_dim * hidden + 2 * N * hidden * 8 + 8 * N * in_dim,
        transcendentals=N,                                   # one rsqrt per row
        bytes_accessed=(N * in_dim * xi
                        + (in_dim * hidden + 9 * hidden) * wi
                        + n_pad * 8 * xi))

    out = pl.pallas_call(
        _baseline_kernel,
        out_shape=jax.ShapeDtypeStruct((n_pad, 8), x.dtype),
        grid_spec=pltpu.PrefetchScalarGridSpec(
            num_scalar_prefetch=0,
            grid=(num_blocks,),
            in_specs=[
                pl.BlockSpec((tm, in_dim), lambda i: (i, 0)),       # x (streamed)
                _resident_spec((in_dim, hidden), lambda i: (0, 0)),  # w1 (gamma folded)
                _resident_spec((1, hidden), lambda i: (0, 0)),       # b1
                _resident_spec((hidden, 8), lambda i: (0, 0)),       # w2 (8 padded cols)
                pl.BlockSpec(memory_space=pltpu.MemorySpace.SMEM),   # b2 scalar
            ],
            out_specs=pl.BlockSpec((tm, 8), lambda i: (i, 0)),
        ),
        compiler_params=pltpu.CompilerParams(
            dimension_semantics=("parallel",),
            vmem_limit_bytes=vmem_limit),
        cost_estimate=cost,
    )(x2d, w1f, b1_2d, w2_pad, b2_s)

    # Column 0 holds the real projection; rows >= N (ragged last block) are dropped.
    return out[:N, 0].reshape(B, S, 1)


def init_params(key, in_dim, hidden_dim, dtype=jnp.float32):
    k1, k2, k3, k4, k5 = jax.random.split(key, 5)
    gamma = (1.0 + 0.5 * jax.random.normal(k1, (in_dim,))).astype(dtype)
    w1 = (jax.random.normal(k2, (in_dim, hidden_dim)) / jnp.sqrt(in_dim)).astype(dtype)
    b1 = (0.5 * jax.random.normal(k3, (hidden_dim,))).astype(dtype)
    w2 = (jax.random.normal(k4, (hidden_dim, 1)) / jnp.sqrt(hidden_dim)).astype(dtype)
    b2 = (0.5 * jax.random.normal(k5, (1,))).astype(dtype)
    return gamma, w1, b1, w2, b2


def _reference(x, gamma, w1, b1, w2, b2):
    mean = jnp.mean(x, axis=-1, keepdims=True)
    var = jnp.mean((x - mean) ** 2, axis=-1, keepdims=True)
    xn = (x - mean) * lax.rsqrt(var + EPS) * gamma
    h = jnp.maximum(xn @ w1 + b1, 0.0)
    return h @ w2.reshape(-1, 1) + b2


if __name__ == "__main__":
    key = jax.random.PRNGKey(0)
    B, S, in_dim, hidden_dim = 2, 8, 32, 32

    kx, kp = jax.random.split(key)
    x = jax.random.normal(kx, (B, S, in_dim), jnp.float32)
    params = init_params(kp, in_dim, hidden_dim)

    out = baseline_forward(x, *params)
    jax.block_until_ready(out)

    ref = _reference(x, *params)
    assert out.shape == (B, S, 1), out.shape
    # Tolerance absorbs MXU default-precision (bf16-pass) differences between the
    # Pallas matmuls and the XLA reference; structural errors would be O(0.1+).
    assert jnp.allclose(out, ref, atol=1e-2, rtol=1e-2), float(
        jnp.max(jnp.abs(out - ref)))

    print("KERNEL_OK")
</pallas_src>

<mosaic_0001>
module attributes {stable_mosaic.version = 11 : i64} {
  func.func @_baseline_kernel(%arg0: i32, %arg1: memref<16x32xf32, #tpu.memory_space<vmem>>, %arg2: memref<32x32xf32, #tpu.memory_space<vmem>>, %arg3: memref<1x32xf32, #tpu.memory_space<vmem>>, %arg4: memref<32x8xf32, #tpu.memory_space<vmem>>, %arg5: memref<1xf32, #tpu.memory_space<smem>>, %arg6: memref<16x8xf32, #tpu.memory_space<vmem>>) attributes {dimension_semantics = [#tpu.dimension_semantics<parallel>], iteration_bounds = array<i64: 1>, scalar_prefetch = 0 : i64, scratch_operands = 0 : i64, tpu.core_type = #tpu.core_type<tc>, window_params = [{transform_indices = @transform_0, window_bounds = array<i64: 16, 32>}, {pipeline_mode = #tpu.pipeline_mode<synchronous>, transform_indices = @transform_1, window_bounds = array<i64: 32, 32>}, {pipeline_mode = #tpu.pipeline_mode<synchronous>, transform_indices = @transform_2, window_bounds = array<i64: 1, 32>}, {pipeline_mode = #tpu.pipeline_mode<synchronous>, transform_indices = @transform_3, window_bounds = array<i64: 32, 8>}, {transform_indices = @transform_4, window_bounds = array<i64: 1>}, {transform_indices = @transform_5, window_bounds = array<i64: 16, 8>}]} {
    %c0 = arith.constant 0 : index
    %c0_0 = arith.constant 0 : index
    %0 = vector.load %arg1[%c0, %c0_0] : memref<16x32xf32, #tpu.memory_space<vmem>>, vector<16x32xf32>
    %cst = arith.constant dense<0.000000e+00> : vector<16xf32>
    %1 = vector.multi_reduction <add>, %0, %cst [1] : vector<16x32xf32> to vector<16xf32>
    %2 = vector.shape_cast %1 : vector<16xf32> to vector<16x1xf32>
    %cst_1 = arith.constant 3.200000e+01 : f32
    %3 = vector.broadcast %cst_1 : f32 to vector<16x1xf32>
    %4 = arith.divf %2, %3 : vector<16x1xf32>
    %5 = vector.broadcast %4 : vector<16x1xf32> to vector<16x32xf32>
    %6 = arith.subf %0, %5 : vector<16x32xf32>
    %7 = arith.mulf %6, %6 : vector<16x32xf32>
    %cst_2 = arith.constant dense<0.000000e+00> : vector<16xf32>
    %8 = vector.multi_reduction <add>, %7, %cst_2 [1] : vector<16x32xf32> to vector<16xf32>
    %9 = vector.shape_cast %8 : vector<16xf32> to vector<16x1xf32>
    %cst_3 = arith.constant 3.200000e+01 : f32
    %10 = vector.broadcast %cst_3 : f32 to vector<16x1xf32>
    %11 = arith.divf %9, %10 : vector<16x1xf32>
    %cst_4 = arith.constant 9.99999974E-6 : f32
    %12 = vector.broadcast %cst_4 : f32 to vector<16x1xf32>
    %13 = arith.addf %11, %12 : vector<16x1xf32>
    %14 = math.rsqrt %13 : vector<16x1xf32>
    %15 = vector.broadcast %14 : vector<16x1xf32> to vector<16x32xf32>
    %16 = arith.mulf %6, %15 : vector<16x32xf32>
    %c0_5 = arith.constant 0 : index
    %c0_6 = arith.constant 0 : index
    %17 = vector.load %arg2[%c0_5, %c0_6] : memref<32x32xf32, #tpu.memory_space<vmem>>, vector<32x32xf32>
    %cst_7 = arith.constant dense<0.000000e+00> : vector<16x32xf32>
    %18 = tpu.matmul %16, %17, %cst_7 {dimension_numbers = #tpu.dot_dimension_numbers<[1], [0], [0], [1], [0, 0, 1, 1], [], []>} : vector<16x32xf32>, vector<32x32xf32>, vector<16x32xf32> -> vector<16x32xf32>
    %c0_8 = arith.constant 0 : index
    %c0_9 = arith.constant 0 : index
    %19 = vector.load %arg3[%c0_8, %c0_9] : memref<1x32xf32, #tpu.memory_space<vmem>>, vector<1x32xf32>
    %20 = vector.broadcast %19 : vector<1x32xf32> to vector<16x32xf32>
    %21 = arith.addf %18, %20 : vector<16x32xf32>
    %cst_10 = arith.constant 0.000000e+00 : f32
    %22 = vector.broadcast %cst_10 : f32 to vector<16x32xf32>
    %23 = arith.maximumf %21, %22 : vector<16x32xf32>
    %c0_11 = arith.constant 0 : index
    %c0_12 = arith.constant 0 : index
    %24 = vector.load %arg4[%c0_11, %c0_12] : memref<32x8xf32, #tpu.memory_space<vmem>>, vector<32x8xf32>
    %cst_13 = arith.constant dense<0.000000e+00> : vector<16x8xf32>
    %25 = tpu.matmul %23, %24, %cst_13 {dimension_numbers = #tpu.dot_dimension_numbers<[1], [0], [0], [1], [0, 0, 1, 1], [], []>} : vector<16x32xf32>, vector<32x8xf32>, vector<16x8xf32> -> vector<16x8xf32>
    %c0_14 = arith.constant 0 : index
    %26 = memref.load %arg5[%c0_14] : memref<1xf32, #tpu.memory_space<smem>>
    %27 = vector.broadcast %26 : f32 to vector<16x8xf32>
    %28 = arith.addf %25, %27 : vector<16x8xf32>
    %c0_15 = arith.constant 0 : index
    %c0_16 = arith.constant 0 : index
    %29 = vector.load %arg6[%c0_15, %c0_16] : memref<16x8xf32, #tpu.memory_space<vmem>>, vector<16x8xf32>
    tpu.vector_store %arg6[%c0_15, %c0_16], %28 {strides = array<i32>} : memref<16x8xf32, #tpu.memory_space<vmem>>, vector<16x8xf32>,
    return
  }
  func.func @transform_0(%arg0: i32) -> (i32, i32) {
    %c0_i32 = arith.constant 0 : i32
    %c0_i32_0 = arith.constant 0 : i32
    return %arg0, %c0_i32 : i32, i32
  }
  func.func @transform_1(%arg0: i32) -> (i32, i32) {
    %c0_i32 = arith.constant 0 : i32
    %c0_i32_0 = arith.constant 0 : i32
    %c0_i32_1 = arith.constant 0 : i32
    return %c0_i32, %c0_i32_0 : i32, i32
  }
  func.func @transform_2(%arg0: i32) -> (i32, i32) {
    %c0_i32 = arith.constant 0 : i32
    %c0_i32_0 = arith.constant 0 : i32
    %c0_i32_1 = arith.constant 0 : i32
    return %c0_i32, %c0_i32_0 : i32, i32
  }
  func.func @transform_3(%arg0: i32) -> (i32, i32) {
    %c0_i32 = arith.constant 0 : i32
    %c0_i32_0 = arith.constant 0 : i32
    %c0_i32_1 = arith.constant 0 : i32
    return %c0_i32, %c0_i32_0 : i32, i32
  }
  func.func @transform_4(%arg0: i32) -> i32 {
    %c0_i32 = arith.constant 0 : i32
    %c0_i32_0 = arith.constant 0 : i32
    return %c0_i32 : i32
  }
  func.func @transform_5(%arg0: i32) -> (i32, i32) {
    %c0_i32 = arith.constant 0 : i32
    %c0_i32_0 = arith.constant 0 : i32
    return %arg0, %c0_i32 : i32, i32
  }
}

</mosaic_0001>

<llo_original>
// kernel: squeeze.1
$region0: #{squeeze.1}
  %s0 = inlined_call_operand.vmem [shape: f32[16], index: 0, kind: input, shape index: {}]
  %s1 = inlined_call_operand.hbm [shape: f32[2,8,1], index: 1, kind: output, shape index: {}]
  $region1: #{squeeze.1} parent=0
    #allocation0 [shape = 'u8[1024]{0}', space=vmem, size = 0x400, scoped, tag = 'operand span for operand 1']
    #allocation1 [shape = 's32[1]{0}', space=sflag, size = 0x4, scoped, tag = 'scoped memory for squeeze.1']
    #allocation2 [shape = 'u8[4096]{0}', space=vmem, size = 0x1000, scoped, tag = 'scoped mem for output reshape']
    #allocation3 [shape = 'u8[4096]{0}', space=vmem, size = 0x1000, scoped, tag = 'scoped mem for input reshape']
    %2 = vsyncpa [#allocation1], 0
    %s4 = sshllo.u32 0, 1
    %v5 = vld [vmem:[%s0] sm:%s4]
    %6 = vst [vmem:[#allocation3] sm:%s4] %v5
    %v7 = vld [vmem:[#allocation3] sm:$0x1]
    %vm8 = vcmask 64512
    %9 = vst.msk [vmem:[#allocation2] sm:$0x1] %vm8, %v7
    %v10 = vld [vmem:[#allocation3] sm:$0x1]
    %11 = vrot.lane.b32.xlu0 %v10, 120
    %v12 = vpop.permute.xlu0 %11
    %vm13 = vcmask 64512
    %s14 = scalar_lea.vmem [#allocation2], 1
    %15 = vst.msk [vmem:[%s14] sm:$0x1] %vm13, %v12
    %s17 = sshllo.u32 0, 2
    %v19 = vld [vmem:[#allocation2] sm:%s17]
    %s20 = sshllo.u32 0, 2
    %21 = vst [vmem:[#allocation0] sm:%s20] %v19
    %s23 = ssub.s32 32, 32
    %24 = vsyncadd [#allocation1], %s23
    %s26 = sshll.u32 [#allocation0], 4
    %s27 = int_to_ptr.vmem [resolvable:$true] %s26
    %29 = dma.vmem_to_hbm [thread:$0]  %s27, 32, %s1, [#allocation1]
    %30 = dma.done [#allocation1], 32
    %31 = vsyncpa [#allocation1], 1

// kernel: baseline_forward.1
$region0: #{baseline_forward.1}
  #allocation0 [shape = 'u32[]', space=smem, size = 0x4, offset = 0x4, fixed_abs, tag = 'smem constant byte address 0x4 - core index']
  #allocation1 [shape = 'u32[144,128]{1,0:T(1,128)}', space=vmem, size = 0x12000, scoped, tag = 'internal scratch']
  #allocation2 [shape = 'f32[1]{0:T(128)S(6)}', space=smem, size = 0x200, scoped, tag = 'scoped memory for baseline_forward.1']
  %s0 = inlined_call_operand.hbm [shape: f32[16,32], index: 0, kind: input, shape index: {}]
  %s1 = inlined_call_operand.hbm [shape: f32[32,32], index: 1, kind: input, shape index: {}]
  %s2 = inlined_call_operand.hbm [shape: f32[1,32], index: 2, kind: input, shape index: {}]
  %s3 = inlined_call_operand.hbm [shape: f32[32,8], index: 3, kind: input, shape index: {}]
  %s4 = inlined_call_operand.<no memory space> [shape: f32[1], index: 4, kind: input, shape index: {}]
  %s5 = inlined_call_operand.hbm [shape: f32[16,8], index: 5, kind: output, shape index: {}]
  %s6 = sld [smem:[#allocation0]]
  $region46: #{baseline_forward.1} parent=0
    _
  %s8 = ssub.s32 1, %s6
  %s9 = scalar_select 0, %s8, %s6
  %10 = sst [smem:[#allocation2]] %s4
  $region1: #{baseline_forward.1} parent=0
    #allocation3 [shape = 'u8[8192]{0}', space=vmem, size = 0x2000, scoped, tag = 'input window, operand 0, single buffered']
    #allocation4 [shape = 's32[1]{0}', space=sflag, size = 0x4, scoped, tag = 'scoped memory for baseline_forward.1']
    #allocation5 [shape = 's32[1]{0}', space=sflag, size = 0x4, scoped, tag = 'scoped memory for baseline_forward.1']
    #allocation6 [shape = 'u8[16384]{0}', space=vmem, size = 0x4000, scoped, tag = 'input window, operand 1, single buffered']
    #allocation7 [shape = 's32[1]{0}', space=sflag, size = 0x4, scoped, tag = 'scoped memory for baseline_forward.1']
    #allocation8 [shape = 'u8[512]{0}', space=vmem, size = 0x400, scoped, tag = 'input window, operand 2, single buffered']
    #allocation9 [shape = 'u8[16384]{0}', space=vmem, size = 0x4000, scoped, tag = 'input window, operand 3, single buffered']
    #allocation10 [shape = 's32[1]{0}', space=sflag, size = 0x4, scoped, tag = 'scoped memory for baseline_forward.1']
    #allocation11 [shape = 'u8[8192]{0}', space=vmem, size = 0x2000, scoped, tag = 'output window, operand 0, single buffered']
    %11 = vsyncpa [#allocation4], 0
    %12 = vsyncpa [#allocation7], 0
    %13 = vsyncpa [#allocation10], 0
    %14 = vsyncpa [#allocation5], 0
    // Predicated region
    $region2: #{baseline_forward.1} parent=1 // pred_check
      _
    $region3: #{baseline_forward.1} parent=1 // pred_check_branch
      %16 = sbr.rel (0) target = $region5
    $region4: #{baseline_forward.1} parent=1 // pred_region
      %s18 = ssub.s32 256, 256
      %19 = vsyncadd [#allocation4], %s18
      %s20 = sshll.u32 [#allocation3], 4
      %s21 = int_to_ptr.vmem [resolvable:$true] %s20
      %26 = dma.hbm_to_vmem [thread:$0]  %s0, 256, %s21, [#allocation4], 128, 128, 8
    $region5: #{baseline_forward.1} parent=1 // pred_fallthru
      _
    // Predicated region
    $region6: #{baseline_forward.1} parent=1 // pred_check
      _
    $region7: #{baseline_forward.1} parent=1 // pred_check_branch
      %28 = sbr.rel (0) target = $region9
    $region8: #{baseline_forward.1} parent=1 // pred_region
      %s30 = ssub.s32 512, 512
      %31 = vsyncadd [#allocation7], %s30
      %s32 = sshll.u32 [#allocation6], 4
      %s33 = int_to_ptr.vmem [resolvable:$true] %s32
      %38 = dma.hbm_to_vmem [thread:$0]  %s1, 512, %s33, [#allocation7], 128, 128, 8
    $region9: #{baseline_forward.1} parent=1 // pred_fallthru
      _
    // Predicated region
    $region10: #{baseline_forward.1} parent=1 // pred_check
      _
    $region11: #{baseline_forward.1} parent=1 // pred_check_branch
      %40 = sbr.rel (0) target = $region13
    $region12: #{baseline_forward.1} parent=1 // pred_region
      %s42 = ssub.s32 16, 16
      %43 = vsyncadd [#allocation7], %s42
      %s45 = sshll.u32 [#allocation8], 4
      %s46 = int_to_ptr.vmem [resolvable:$true] %s45
      %48 = dma.hbm_to_vmem [thread:$0]  %s2, 16, %s46, [#allocation7]
    $region13: #{baseline_forward.1} parent=1 // pred_fallthru
      _
    // Predicated region
    $region14: #{baseline_forward.1} parent=1 // pred_check
      _
    $region15: #{baseline_forward.1} parent=1 // pred_check_branch
      %50 = sbr.rel (0) target = $region17
    $region16: #{baseline_forward.1} parent=1 // pred_region
      %s52 = ssub.s32 512, 512
      %53 = vsyncadd [#allocation10], %s52
      %s54 = sshll.u32 [#allocation9], 4
      %s55 = int_to_ptr.vmem [resolvable:$true] %s54
      %60 = dma.hbm_to_vmem [thread:$0]  %s3, 512, %s55, [#allocation10], 128, 128, 8
    $region17: #{baseline_forward.1} parent=1 // pred_fallthru
      _
    // Predicated region
    $region18: #{baseline_forward.1} parent=1 // pred_check
      _
    $region19: #{baseline_forward.1} parent=1 // pred_check_branch
      %62 = sbr.rel (0) target = $region21
    $region20: #{baseline_forward.1} parent=1 // pred_region
      _
    $region21: #{baseline_forward.1} parent=1 // pred_fallthru
      _
    // Predicated region
    $region22: #{baseline_forward.1} parent=1 // pred_check
      _
    $region23: #{baseline_forward.1} parent=1 // pred_check_branch
      %64 = sbr.rel (0) target = $region25
    $region24: #{baseline_forward.1} parent=1 // pred_region
      %65 = dma.done [#allocation4], 256
    $region25: #{baseline_forward.1} parent=1 // pred_fallthru
      _
    // Predicated region
    $region26: #{baseline_forward.1} parent=1 // pred_check
      _
    $region27: #{baseline_forward.1} parent=1 // pred_check_branch
      %67 = sbr.rel (0) target = $region29
    $region28: #{baseline_forward.1} parent=1 // pred_region
      %68 = dma.done [#allocation7], 512
    $region29: #{baseline_forward.1} parent=1 // pred_fallthru
      _
    // Predicated region
    $region30: #{baseline_forward.1} parent=1 // pred_check
      _
    $region31: #{baseline_forward.1} parent=1 // pred_check_branch
      %70 = sbr.rel (0) target = $region33
    $region32: #{baseline_forward.1} parent=1 // pred_region
      %71 = dma.done [#allocation7], 16
    $region33: #{baseline_forward.1} parent=1 // pred_fallthru
      _
    // Predicated region
    $region34: #{baseline_forward.1} parent=1 // pred_check
      _
    $region35: #{baseline_forward.1} parent=1 // pred_check_branch
      %73 = sbr.rel (0) target = $region37
    $region36: #{baseline_forward.1} parent=1 // pred_region
      %74 = dma.done [#allocation10], 512
    $region37: #{baseline_forward.1} parent=1 // pred_fallthru
      _
    %v75 = vld [vmem:[#allocation3] sm:$0xff]
    %v76 = vld [vmem:[#allocation3 + $0x8] sm:$0xff]
    %vm77 = vcmask 261120
    %v78 = vsel %vm77, %v75, 0.0
    %79 = vadd.xlane.f32.xlu0 %v78
    %v80 = vpop.xlane.xlu0 %79
    %v81 = vsel %vm77, %v76, 0.0
    %82 = vadd.xlane.f32.xlu0 %v81
    %v83 = vpop.xlane.xlu0 %82
    %v84 = vrcp.pop 32.0
    %v85 = vmul.f32 %v80, %v84
    %v86 = vmul.f32 %v83, %v84
    %v87 = vsub.f32 %v75, %v85
    %v88 = vsub.f32 %v76, %v86
    %v89 = vmul.f32 %v87, %v87
    %v90 = vmul.f32 %v88, %v88
    %v91 = vsel %vm77, %v89, 0.0
    %92 = vadd.xlane.f32.xlu0 %v91
    %v93 = vpop.xlane.xlu0 %92
    %v94 = vsel %vm77, %v90, 0.0
    %95 = vadd.xlane.f32.xlu0 %v94
    %v96 = vpop.xlane.xlu0 %95
    %v97 = vmul.f32 %v93, %v84
    %v98 = vmul.f32 %v96, %v84
    %v99 = vadd.f32 %v97, 1e-05
    %v100 = vadd.f32 %v98, 1e-05
    %v101 = vrsqrt.pop %v99
    %v102 = vrsqrt.pop %v100
    %v103 = vmul.f32 %v87, %v101
    %v104 = vmul.f32 %v88, %v102
    %v105 = vld [vmem:[#allocation6] sm:$0xff]
    %v106 = vld [vmem:[#allocation6 + $0x8] sm:$0xff]
    %v107 = vld [vmem:[#allocation6 + $0x10] sm:$0xff]
    %v108 = vld [vmem:[#allocation6 + $0x18] sm:$0xff]
    %v109 = vld [vmem:[#allocation8] sm:$0x1]
    %v111 = vlaneseq
    %v112 = vshrl.u32 %v111, 7
    %v113 = vsub.s32 0, %v112
    %v114 = vrot.slane %v109, %v113
    %v117 = vsel %vm77, %v103, 0
    %v120 = vsel %vm77, %v104, 0
    %122 = vmatprep.subr.mxu0 0.0
    %123 = vmatpush1.msra.mxu0 %v105
    %124 = vmatprep.subr.mxu0 0.0
    %125 = vmatpush1.msra.mxu0 %v106
    %126 = vmatprep.subr.mxu0 0.0
    %127 = vmatpush1.msra.mxu0 %v107
    %128 = vmatprep.subr.mxu0 0.0
    %129 = vmatpush1.msra.mxu0 %v108
    %130 = vmatprep.subr.mxu0 0.0
    %131 = vmatpush1.msra.mxu0 0.0
    %132 = vmatprep.subr.mxu0 0.0
    %133 = vmatpush1.msra.mxu0 0.0
    %134 = vmatprep.subr.mxu0 0.0
    %135 = vmatpush1.msra.mxu0 0.0
    %136 = vmatprep.subr.mxu0 0.0
    %137 = vmatpush1.msra.mxu0 0.0
    %138 = vmatprep.subr.mxu0 0.0
    %139 = vmatpush1.msra.mxu0 0.0
    %140 = vmatprep.subr.mxu0 0.0
    %141 = vmatpush1.msra.mxu0 0.0
    %142 = vmatprep.subr.mxu0 0.0
    %143 = vmatpush1.msra.mxu0 0.0
    %144 = vmatprep.subr.mxu0 0.0
    %145 = vmatpush1.msra.mxu0 0.0
    %146 = vmatprep.subr.mxu0 0.0
    %147 = vmatpush1.msra.mxu0 0.0
    %148 = vmatprep.subr.mxu0 0.0
    %149 = vmatpush1.msra.mxu0 0.0
    %150 = vmatprep.subr.mxu0 0.0
    %151 = vmatpush1.msra.mxu0 0.0
    %152 = vmatprep.subr.mxu0 0.0
    %153 = vmatpush1.msra.mxu0 0.0
    %154 = vmatprep.subr.mxu0 0.0
    %155 = vmatpush1.msra.mxu0 0.0
    %156 = vmatprep.subr.mxu0 0.0
    %157 = vmatpush1.msra.mxu0 0.0
    %158 = vmatprep.subr.mxu0 0.0
    %159 = vmatpush1.msra.mxu0 0.0
    %160 = vmatprep.subr.mxu0 0.0
    %161 = vmatpush1.msra.mxu0 0.0
    %162 = vmatprep.subr.mxu0 0.0
    %163 = vmatpush1.msra.mxu0 0.0
    %164 = vmatprep.subr.mxu0 0.0
    %165 = vmatpush1.msra.mxu0 0.0
    %166 = vmatprep.subr.mxu0 0.0
    %167 = vmatpush1.msra.mxu0 0.0
    %168 = vmatprep.subr.mxu0 0.0
    %169 = vmatpush1.msra.mxu0 0.0
    %170 = vmatprep.subr.mxu0 0.0
    %171 = vmatpush1.msra.mxu0 0.0
    %172 = vmatprep.subr.mxu0 0.0
    %173 = vmatpush1.msra.mxu0 0.0
    %174 = vmatprep.subr.mxu0 0.0
    %175 = vmatpush1.msra.mxu0 0.0
    %176 = vmatprep.subr.mxu0 0.0
    %177 = vmatpush1.msra.mxu0 0.0
    %178 = vmatprep.subr.mxu0 0.0
    %179 = vmatpush1.msra.mxu0 0.0
    %180 = vmatprep.subr.mxu0 0.0
    %181 = vmatpush1.msra.mxu0 0.0
    %182 = vmatprep.subr.mxu0 0.0
    %183 = vmatpush1.msra.mxu0 0.0
    %184 = vmatprep.subr.mxu0 0.0
    %185 = vmatpush1.msra.mxu0 0.0
    %186 = vmatprep.mubr.f32.mxu0 0.0
    %187 = vmatmul.mubr.f32.gmra.mrb[0].mxu0 %v117
    %v188 = vpop.f32.mrb[0].mxu0
    %v189 = vadd.f32 %v114, %v188
    %v190 = vpop.f32.mrb[0].mxu0
    %191 = vmatprep.mubr.f32.mxu0 0.0
    %192 = vmatmul.mubr.f32.gmra.mrb[0].mxu0 %v120
    %v193 = vpop.f32.mrb[0].mxu0
    %v194 = vadd.f32 %v114, %v193
    %v195 = vpop.f32.mrb[0].mxu0
    %196 = vdwg.mxu0
    %v197 = vmax.f32 %v189, 0.0
    %v198 = vmax.f32 %v194, 0.0
    %v199 = vld [vmem:[#allocation9] sm:$0xff]
    %v200 = vld [vmem:[#allocation9 + $0x8] sm:$0xff]
    %v201 = vld [vmem:[#allocation9 + $0x10] sm:$0xff]
    %v202 = vld [vmem:[#allocation9 + $0x18] sm:$0xff]
    %s203 = sld [smem:[#allocation2]]
    %v204 = vstv %s203
    %v206 = vsel %vm77, %v197, 0
    %v209 = vsel %vm77, %v198, 0
    %211 = vmatprep.subr.mxu0 0.0
    %212 = vmatpush1.msra.mxu0 %v199
    %213 = vmatprep.subr.mxu0 0.0
    %214 = vmatpush1.msra.mxu0 %v200
    %215 = vmatprep.subr.mxu0 0.0
    %216 = vmatpush1.msra.mxu0 %v201
    %217 = vmatprep.subr.mxu0 0.0
    %218 = vmatpush1.msra.mxu0 %v202
    %219 = vmatprep.subr.mxu0 0.0
    %220 = vmatpush1.msra.mxu0 0.0
    %221 = vmatprep.subr.mxu0 0.0
    %222 = vmatpush1.msra.mxu0 0.0
    %223 = vmatprep.subr.mxu0 0.0
    %224 = vmatpush1.msra.mxu0 0.0
    %225 = vmatprep.subr.mxu0 0.0
    %226 = vmatpush1.msra.mxu0 0.0
    %227 = vmatprep.subr.mxu0 0.0
    %228 = vmatpush1.msra.mxu0 0.0
    %229 = vmatprep.subr.mxu0 0.0
    %230 = vmatpush1.msra.mxu0 0.0
    %231 = vmatprep.subr.mxu0 0.0
    %232 = vmatpush1.msra.mxu0 0.0
    %233 = vmatprep.subr.mxu0 0.0
    %234 = vmatpush1.msra.mxu0 0.0
    %235 = vmatprep.subr.mxu0 0.0
    %236 = vmatpush1.msra.mxu0 0.0
    %237 = vmatprep.subr.mxu0 0.0
    %238 = vmatpush1.msra.mxu0 0.0
    %239 = vmatprep.subr.mxu0 0.0
    %240 = vmatpush1.msra.mxu0 0.0
    %241 = vmatprep.subr.mxu0 0.0
    %242 = vmatpush1.msra.mxu0 0.0
    %243 = vmatprep.subr.mxu0 0.0
    %244 = vmatpush1.msra.mxu0 0.0
    %245 = vmatprep.subr.mxu0 0.0
    %246 = vmatpush1.msra.mxu0 0.0
    %247 = vmatprep.subr.mxu0 0.0
    %248 = vmatpush1.msra.mxu0 0.0
    %249 = vmatprep.subr.mxu0 0.0
    %250 = vmatpush1.msra.mxu0 0.0
    %251 = vmatprep.subr.mxu0 0.0
    %252 = vmatpush1.msra.mxu0 0.0
    %253 = vmatprep.subr.mxu0 0.0
    %254 = vmatpush1.msra.mxu0 0.0
    %255 = vmatprep.subr.mxu0 0.0
    %256 = vmatpush1.msra.mxu0 0.0
    %257 = vmatprep.subr.mxu0 0.0
    %258 = vmatpush1.msra.mxu0 0.0
    %259 = vmatprep.subr.mxu0 0.0
    %260 = vmatpush1.msra.mxu0 0.0
    %261 = vmatprep.subr.mxu0 0.0
    %262 = vmatpush1.msra.mxu0 0.0
    %263 = vmatprep.subr.mxu0 0.0
    %264 = vmatpush1.msra.mxu0 0.0
    %265 = vmatprep.subr.mxu0 0.0
    %266 = vmatpush1.msra.mxu0 0.0
    %267 = vmatprep.subr.mxu0 0.0
    %268 = vmatpush1.msra.mxu0 0.0
    %269 = vmatprep.subr.mxu0 0.0
    %270 = vmatpush1.msra.mxu0 0.0
    %271 = vmatprep.subr.mxu0 0.0
    %272 = vmatpush1.msra.mxu0 0.0
    %273 = vmatprep.subr.mxu0 0.0
    %274 = vmatpush1.msra.mxu0 0.0
    %275 = vmatprep.mubr.f32.mxu0 0.0
    %276 = vmatmul.mubr.f32.gmra.mrb[0].mxu0 %v206
    %v277 = vpop.f32.mrb[0].mxu0
    %v278 = vadd.f32 %v204, %v277
    %v279 = vpop.f32.mrb[0].mxu0
    %280 = vmatprep.mubr.f32.mxu0 0.0
    %281 = vmatmul.mubr.f32.gmra.mrb[0].mxu0 %v209
    %v282 = vpop.f32.mrb[0].mxu0
    %v283 = vadd.f32 %v204, %v282
    %v284 = vpop.f32.mrb[0].mxu0
    %285 = vdwg.mxu0
    %vm286 = vcmask 64512
    %287 = vst.msk [vmem:[#allocation11] sm:$0xff] %vm286, %v278
    %288 = vst.msk [vmem:[#allocation11 + $0x8] sm:$0xff] %vm286, %v283
    // Predicated region
    $region38: #{baseline_forward.1} parent=1 // pred_check
      _
    $region39: #{baseline_forward.1} parent=1 // pred_check_branch
      %290 = sbr.rel (0) target = $region41
    $region40: #{baseline_forward.1} parent=1 // pred_region
      %s292 = ssub.s32 256, 256
      %293 = vsyncadd [#allocation5], %s292
      %s294 = sshll.u32 [#allocation11], 4
      %s295 = int_to_ptr.vmem [resolvable:$true] %s294
      %300 = dma.vmem_to_hbm [thread:$0]  %s295, 256, %s5, [#allocation5], 128, 128, 8
    $region41: #{baseline_forward.1} parent=1 // pred_fallthru
      _
    // Predicated region
    $region42: #{baseline_forward.1} parent=1 // pred_check
      _
    $region43: #{baseline_forward.1} parent=1 // pred_check_branch
      %302 = sbr.rel (0) target = $region45
    $region44: #{baseline_forward.1} parent=1 // pred_region
      %303 = dma.done [#allocation5], 256
    $region45: #{baseline_forward.1} parent=1 // pred_fallthru
      _
    %304 = vsyncpa [#allocation4], 1
    %305 = vsyncpa [#allocation7], 1
    %306 = vsyncpa [#allocation10], 1
    %307 = vsyncpa [#allocation5], 1

</llo_original>
